<compile_context>
chip_gen: v6e
topology: v6e:2x2x1
jax: 0.10.0
libtpu: 0.0.40
codegen_flags: <defaults>
</compile_context>

<pallas_src>
import jax
import jax.numpy as jnp
from jax.experimental import pallas as pl
from jax.experimental.pallas import tpu as pltpu

_LANES = 128
_SMALL_ROWS = 4096          # <= 2 MiB f32: single grid-free invocation
_TILE_ROWS = 2048           # 2048 * 128 * 4 B = 1 MiB f32 per block


def _skip_init_kernel(ab_ref, x_ref, o_ref):
    # ab_ref: (2,) f32 in SMEM -> [alpha, beta]
    # x_ref / o_ref: (rows, 128) tiles in VMEM
    a = ab_ref[0]
    b = ab_ref[1]
    y = a * x_ref[...].astype(jnp.float32) + b
    o_ref[...] = y.astype(o_ref.dtype)


def skip_init(x, alpha, beta, *, tile_rows=_TILE_ROWS):
    """y = alpha * x + beta, elementwise, alpha/beta scalar parameters."""
    orig_shape = x.shape
    orig_dtype = x.dtype
    n = x.size

    # Pack the two scalar parameters into one tiny 1-D SMEM array.
    ab = jnp.stack(
        [
            jnp.asarray(alpha, jnp.float32).reshape(()),
            jnp.asarray(beta, jnp.float32).reshape(()),
        ]
    )  # shape (2,), float32

    flat = x.reshape(-1)
    rows = pl.cdiv(n, _LANES)

    if rows <= _SMALL_ROWS:
        # ---- small path: single invocation, no grid / pipelining ----
        rows_padded = ((rows + 7) // 8) * 8          # sublane alignment only
        pad = rows_padded * _LANES - n
        if pad:
            flat = jnp.pad(flat, (0, pad))           # single fused pad (or none)
        x2d = flat.reshape(rows_padded, _LANES)

        out2d = pl.pallas_call(
            _skip_init_kernel,
            out_shape=jax.ShapeDtypeStruct((rows_padded, _LANES), orig_dtype),
            in_specs=[
                pl.BlockSpec(memory_space=pltpu.MemorySpace.SMEM),   # [alpha, beta]
                pl.BlockSpec(memory_space=pltpu.MemorySpace.VMEM),   # whole slab
            ],
            out_specs=pl.BlockSpec(memory_space=pltpu.MemorySpace.VMEM),
            input_output_aliases={1: 0},             # donate x slab as output
        )(ab, x2d)
    else:
        # ---- large path: lane-dense slab, 1 MiB tiles, parallel 1-D grid ----
        tr = max(8, (tile_rows // 8) * 8)            # keep sublane-aligned
        rows_padded = ((rows + tr - 1) // tr) * tr   # pad to a tile multiple
        pad = rows_padded * _LANES - n
        if pad:
            flat = jnp.pad(flat, (0, pad))           # single fused pad
        x2d = flat.reshape(rows_padded, _LANES)
        grid = (rows_padded // tr,)                  # >= 2 steps by construction

        out2d = pl.pallas_call(
            _skip_init_kernel,
            out_shape=jax.ShapeDtypeStruct((rows_padded, _LANES), orig_dtype),
            grid_spec=pltpu.PrefetchScalarGridSpec(
                num_scalar_prefetch=0,
                grid=grid,
                in_specs=[
                    pl.BlockSpec(memory_space=pltpu.MemorySpace.SMEM),
                    pl.BlockSpec((tr, _LANES), lambda i: (i, 0)),
                ],
                out_specs=pl.BlockSpec((tr, _LANES), lambda i: (i, 0)),
            ),
            input_output_aliases={1: 0},             # donate padded slab as output
            compiler_params=pltpu.CompilerParams(
                dimension_semantics=("parallel",),   # megacore-shardable on v7x
            ),
        )(ab, x2d)

    out_flat = out2d.reshape(-1)
    if out_flat.shape[0] != n:
        out_flat = out_flat[:n]
    return out_flat.reshape(orig_shape)


if __name__ == "__main__":
    key = jax.random.PRNGKey(0)
    x = jax.random.normal(key, (2, 4, 16, 16), dtype=jnp.float32)

    # Parameter init matching nn.Parameter(torch.ones(1)) / torch.zeros(1).
    alpha = jnp.ones((1,), dtype=jnp.float32)
    beta = jnp.zeros((1,), dtype=jnp.float32)

    ref = alpha[0] * x + beta[0]
    y = jax.block_until_ready(skip_init(x, alpha, beta))
    assert y.shape == x.shape and y.dtype == x.dtype
    assert jnp.allclose(y, ref, atol=1e-6, rtol=1e-6)

    # Non-trivial parameters (exercises the actual math, small grid-free path).
    a2 = jnp.full((1,), 1.5, dtype=jnp.float32)
    b2 = jnp.full((1,), -0.25, dtype=jnp.float32)
    ref2 = a2[0] * x + b2[0]
    y2 = jax.block_until_ready(skip_init(x, a2, b2))
    assert jnp.allclose(y2, ref2, atol=1e-6, rtol=1e-6)

    # Larger, non-tile-divisible input: exercises the padded, tiled,
    # double-buffered path (rows > 4096 -> grid of >= 2 parallel steps).
    xl = jax.random.normal(jax.random.PRNGKey(1), (8, 16, 64, 67), dtype=jnp.float32)
    refl = a2[0] * xl + b2[0]
    yl = jax.block_until_ready(skip_init(xl, a2, b2))
    assert yl.shape == xl.shape and yl.dtype == xl.dtype
    assert jnp.allclose(yl, refl, atol=1e-6, rtol=1e-6)

    print("KERNEL_OK")
</pallas_src>

<mosaic_0001>
module attributes {stable_mosaic.version = 11 : i64} {
  func.func @_skip_init_kernel(%arg0: memref<2xf32, #tpu.memory_space<smem>>, %arg1: memref<16x128xf32, #tpu.memory_space<vmem>>, %arg2: memref<16x128xf32, #tpu.memory_space<vmem>>) attributes {dimension_semantics = [], scalar_prefetch = 0 : i64, scratch_operands = 0 : i64, tpu.core_type = #tpu.core_type<tc>} {
    %c0 = arith.constant 0 : index
    %0 = memref.load %arg0[%c0] : memref<2xf32, #tpu.memory_space<smem>>
    %c1 = arith.constant 1 : index
    %1 = memref.load %arg0[%c1] : memref<2xf32, #tpu.memory_space<smem>>
    %c0_0 = arith.constant 0 : index
    %c0_1 = arith.constant 0 : index
    %2 = vector.load %arg1[%c0_0, %c0_1] : memref<16x128xf32, #tpu.memory_space<vmem>>, vector<16x128xf32>
    %3 = vector.broadcast %0 : f32 to vector<16x128xf32>
    %4 = arith.mulf %3, %2 : vector<16x128xf32>
    %5 = vector.broadcast %1 : f32 to vector<16x128xf32>
    %6 = arith.addf %4, %5 : vector<16x128xf32>
    %c0_2 = arith.constant 0 : index
    %c0_3 = arith.constant 0 : index
    %7 = vector.load %arg2[%c0_2, %c0_3] : memref<16x128xf32, #tpu.memory_space<vmem>>, vector<16x128xf32>
    tpu.vector_store %arg2[%c0_2, %c0_3], %6 {strides = array<i32>} : memref<16x128xf32, #tpu.memory_space<vmem>>, vector<16x128xf32>,
    return
  }
}

</mosaic_0001>

<llo_original>
// kernel: tpu_custom_call.1
$region0: #{tpu_custom_call.1}
  #allocation0 [shape = 'u32[]', space=smem, size = 0x4, offset = 0x4, fixed_abs, tag = 'smem constant byte address 0x4 - core index']
  #allocation1 [shape = 'u32[144,128]{1,0:T(1,128)}', space=vmem, size = 0x12000, scoped, tag = 'internal scratch']
  %s0 = inlined_call_operand.vmem [shape: f32[2], index: 0, kind: input, shape index: {}]
  %s1 = inlined_call_operand.hbm [shape: f32[16,128], index: 1, kind: input, shape index: {}, may-alias: {1,2}]
  %s2 = inlined_call_operand.hbm [shape: f32[16,128], index: 2, kind: output, shape index: {}, may-alias: {1,2}]
  %s3 = sld [smem:[#allocation0]]
  $region26: #{tpu_custom_call.1} parent=0
    _
  %s5 = ssub.s32 1, %s3
  %s6 = scalar_select 0, %s5, %s3
  $region1: #{tpu_custom_call.1} parent=0
    #allocation2 [shape = 'u8[512]{0}', space=smem, size = 0x200, scoped, tag = 'input window, operand 0, single buffered']
    #allocation3 [shape = 's32[1]{0}', space=sflag, size = 0x4, scoped, tag = 'scoped memory for tpu_custom_call.1']
    #allocation4 [shape = 's32[1]{0}', space=sflag, size = 0x4, scoped, tag = 'scoped memory for tpu_custom_call.1']
    #allocation5 [shape = 's32[1]{0}', space=sflag, size = 0x4, scoped, tag = 'scoped memory for tpu_custom_call.1']
    #allocation6 [shape = 'u8[8192]{0}', space=vmem, size = 0x2000, scoped, tag = 'input window, operand 1, single buffered']
    #allocation7 [shape = 'u8[8192]{0}', space=vmem, size = 0x2000, scoped, tag = 'output window, operand 0, single buffered']
    %7 = vsyncpa [#allocation5], 0
    %8 = vsyncpa [#allocation3], 0
    %9 = vsyncpa [#allocation4], 0
    // Predicated region
    $region2: #{tpu_custom_call.1} parent=1 // pred_check
      _
    $region3: #{tpu_custom_call.1} parent=1 // pred_check_branch
      %11 = sbr.rel (0) target = $region5
    $region4: #{tpu_custom_call.1} parent=1 // pred_region
      %s13 = ssub.s32 16, 16
      %14 = vsyncadd [#allocation5], %s13
      %s16 = sshll.u32 %s0, 4
      %s17 = int_to_ptr.vmem [resolvable:$true] %s16
      %19 = dma.vmem_to_smem %s17, 16, [#allocation2], [#allocation5]
    $region5: #{tpu_custom_call.1} parent=1 // pred_fallthru
      _
    // Predicated region
    $region6: #{tpu_custom_call.1} parent=1 // pred_check
      _
    $region7: #{tpu_custom_call.1} parent=1 // pred_check_branch
      %21 = sbr.rel (0) target = $region9
    $region8: #{tpu_custom_call.1} parent=1 // pred_region
      %s23 = ssub.s32 256, 256
      %24 = vsyncadd [#allocation3], %s23
      %s25 = sshll.u32 [#allocation6], 4
      %s26 = int_to_ptr.vmem [resolvable:$true] %s25
      %31 = dma.hbm_to_vmem [thread:$0]  %s1, 256, %s26, [#allocation3], 128, 128, 8
    $region9: #{tpu_custom_call.1} parent=1 // pred_fallthru
      _
    // Predicated region
    $region10: #{tpu_custom_call.1} parent=1 // pred_check
      _
    $region11: #{tpu_custom_call.1} parent=1 // pred_check_branch
      %33 = sbr.rel (0) target = $region13
    $region12: #{tpu_custom_call.1} parent=1 // pred_region
      %34 = dma.done [#allocation5], 16
    $region13: #{tpu_custom_call.1} parent=1 // pred_fallthru
      _
    // Predicated region
    $region14: #{tpu_custom_call.1} parent=1 // pred_check
      _
    $region15: #{tpu_custom_call.1} parent=1 // pred_check_branch
      %36 = sbr.rel (0) target = $region17
    $region16: #{tpu_custom_call.1} parent=1 // pred_region
      %37 = dma.done [#allocation3], 256
    $region17: #{tpu_custom_call.1} parent=1 // pred_fallthru
      _
    %38 = sfence
    %s39 = sld [smem:[#allocation2]]
    %s40 = sld [smem:[#allocation2 + $0x1]]
    %v41 = vld [vmem:[#allocation6] sm:$0xff]
    %v42 = vld [vmem:[#allocation6 + $0x8] sm:$0xff]
    %v43 = vstv %s39
    %v44 = vmul.f32 %v43, %v41
    %v45 = vmul.f32 %v43, %v42
    %v46 = vstv %s40
    %v47 = vadd.f32 %v44, %v46
    %v48 = vadd.f32 %v45, %v46
    %49 = vst [vmem:[#allocation7] sm:$0xff] %v47
    %50 = vst [vmem:[#allocation7 + $0x8] sm:$0xff] %v48
    // Predicated region
    $region18: #{tpu_custom_call.1} parent=1 // pred_check
      _
    $region19: #{tpu_custom_call.1} parent=1 // pred_check_branch
      %52 = sbr.rel (0) target = $region21
    $region20: #{tpu_custom_call.1} parent=1 // pred_region
      %s54 = ssub.s32 256, 256
      %55 = vsyncadd [#allocation4], %s54
      %s56 = sshll.u32 [#allocation7], 4
      %s57 = int_to_ptr.vmem [resolvable:$true] %s56
      %62 = dma.vmem_to_hbm [thread:$0]  %s57, 256, %s2, [#allocation4], 128, 128, 8
    $region21: #{tpu_custom_call.1} parent=1 // pred_fallthru
      _
    // Predicated region
    $region22: #{tpu_custom_call.1} parent=1 // pred_check
      _
    $region23: #{tpu_custom_call.1} parent=1 // pred_check_branch
      %64 = sbr.rel (0) target = $region25
    $region24: #{tpu_custom_call.1} parent=1 // pred_region
      %65 = dma.done [#allocation4], 256
    $region25: #{tpu_custom_call.1} parent=1 // pred_fallthru
      _
    %66 = vsyncpa [#allocation3], 1
    %67 = vsyncpa [#allocation4], 1
    %68 = vsyncpa [#allocation5], 1

</llo_original>
